<compile_context>
chip_gen: v5e
topology: v5e:2x2
jax: 0.10.0
libtpu: 0.0.40
codegen_flags: <defaults>
</compile_context>

<pallas_src>
import jax
import jax.numpy as jnp
from jax.experimental import pallas as pl
from jax.experimental.pallas import tpu as pltpu


def _round_up(x, m):
    return (x + m - 1) // m * m


def _mxu_m_rows():
    # v5e/v5p MXUs are 128x128 -> 128-row tiles already saturate the M
    # dimension; v6e/v7x MXUs are 256x256 -> use 256-row tiles.
    try:
        kind = jax.devices()[0].device_kind.lower()
    except Exception:
        return 256
    return 128 if "v5" in kind else 256


# ---------------------------------------------------------------------------
# Kernel 1 (grouped / fused): visual_projection + L2 normalization for all
# visual modalities in one call.
#   tile_group (scalar prefetch, SMEM): [num_tiles] int32 -> weight slab index
#   x_cat: [R_total, H]  bf16, row-concatenated pooled outputs (tile-padded)
#   w_stack: [G, H, P]   bf16, per-modality visual_projection weights
#   out:   [R_total, P]  f32
# The weight slab is selected entirely inside the index_map via the prefetched
# group ids, so the kernel body is branch-free and text never enters this path.
# ---------------------------------------------------------------------------
def _grouped_proj_norm_kernel(tile_group_ref, x_ref, w_ref, o_ref):
    del tile_group_ref  # weight already selected via the index_map
    # bf16 x bf16 -> f32 accumulate on the MXU.
    y = jnp.dot(x_ref[...], w_ref[...], preferred_element_type=jnp.float32)
    # Clamped L2 norm (zero / padding rows -> 0, not NaN), f32 throughout.
    inv = jax.lax.rsqrt(jnp.maximum(jnp.sum(y * y, axis=-1, keepdims=True),
                                    1e-12))
    o_ref[...] = (y * inv).astype(o_ref.dtype)


def grouped_project_l2_normalize(tile_group, x_cat, w_stack, *, tb,
                                 out_dtype=jnp.float32):
    R, H = x_cat.shape
    G, _, P = w_stack.shape
    assert R % tb == 0
    num_tiles = R // tb
    cost = pl.CostEstimate(
        flops=2 * R * H * P + 3 * R * P,        # matmul + square/sum/scale
        transcendentals=R,                      # one rsqrt per row
        bytes_accessed=(x_cat.size * x_cat.dtype.itemsize
                        + w_stack.size * w_stack.dtype.itemsize
                        + R * P * jnp.dtype(out_dtype).itemsize),
    )
    return pl.pallas_call(
        _grouped_proj_norm_kernel,
        out_shape=jax.ShapeDtypeStruct((R, P), out_dtype),
        grid_spec=pltpu.PrefetchScalarGridSpec(
            num_scalar_prefetch=1,
            grid=(num_tiles,),
            in_specs=[
                # x tile: [tb, H]
                pl.BlockSpec((tb, H), lambda i, tg: (i, 0)),
                # weight slab selected by the per-tile group id: kernel sees
                # a 2-D [H, P] ref (leading dim squeezed).
                pl.BlockSpec((pl.Squeezed(), H, P),
                             lambda i, tg: (tg[i], 0, 0)),
            ],
            out_specs=pl.BlockSpec((tb, P), lambda i, tg: (i, 0)),
        ),
        compiler_params=pltpu.CompilerParams(
            dimension_semantics=("parallel",)),
        cost_estimate=cost,
    )(tile_group, x_cat, w_stack)


# ---------------------------------------------------------------------------
# Kernel 2: L2 normalization only (text modality; no visual_projection).
# ---------------------------------------------------------------------------
def _l2_norm_kernel(x_ref, o_ref):
    x = x_ref[...].astype(jnp.float32)
    inv = jax.lax.rsqrt(jnp.maximum(jnp.sum(x * x, axis=-1, keepdims=True),
                                    1e-12))
    o_ref[...] = (x * inv).astype(o_ref.dtype)


def l2_normalize(x, *, max_tile=512):
    R, H = x.shape
    tb = min(_round_up(R, 8), max_tile)
    r_pad = _round_up(R, tb)
    xp = jnp.pad(x, ((0, r_pad - R), (0, 0)))
    cost = pl.CostEstimate(
        flops=3 * r_pad * H, transcendentals=r_pad,
        bytes_accessed=2 * r_pad * H * x.dtype.itemsize)
    y = pl.pallas_call(
        _l2_norm_kernel,
        out_shape=jax.ShapeDtypeStruct((r_pad, H), x.dtype),
        grid=(r_pad // tb,),
        in_specs=[pl.BlockSpec((tb, H), lambda i: (i, 0))],
        out_specs=pl.BlockSpec((tb, H), lambda i: (i, 0)),
        compiler_params=pltpu.CompilerParams(
            dimension_semantics=("parallel",)),
        cost_estimate=cost,
    )(xp)
    return y[:R]


# ---------------------------------------------------------------------------
# Kernel 3: temporal mean pooling of video tokens:
#   last_hidden_state.reshape(-1, F, T, D).mean(axis=1)
# F is the innermost "arbitrary" reduction grid axis with an f32 VMEM
# accumulator, so the per-step VMEM footprint is tb*T*D regardless of F.
# ---------------------------------------------------------------------------
def _temporal_mean_kernel(x_ref, o_ref, acc_ref):
    f = pl.program_id(1)

    @pl.when(f == 0)
    def _():
        acc_ref[...] = jnp.zeros_like(acc_ref)

    acc_ref[...] += x_ref[...].astype(jnp.float32)          # [tb, T, D]

    @pl.when(f == pl.num_programs(1) - 1)
    def _():
        o_ref[...] = (acc_ref[...] * (1.0 / pl.num_programs(1))
                      ).astype(o_ref.dtype)


def temporal_mean(x, *, tile_budget_bytes=4 << 20):
    B, F, T, D = x.shape
    bytes_per_row = T * D * x.dtype.itemsize
    tb = max(1, min(B, tile_budget_bytes // max(1, bytes_per_row)))
    cost = pl.CostEstimate(
        flops=B * F * T * D,
        transcendentals=0,
        bytes_accessed=(x.size + B * T * D) * x.dtype.itemsize)
    return pl.pallas_call(
        _temporal_mean_kernel,
        out_shape=jax.ShapeDtypeStruct((B, T, D), x.dtype),
        grid=(pl.cdiv(B, tb), F),
        in_specs=[pl.BlockSpec((tb, pl.Squeezed(), T, D),
                               lambda b, f: (b, f, 0, 0))],
        out_specs=pl.BlockSpec((tb, T, D), lambda b, f: (b, 0, 0)),
        scratch_shapes=[pltpu.VMEM((tb, T, D), jnp.float32)],
        compiler_params=pltpu.CompilerParams(
            dimension_semantics=("parallel", "arbitrary")),
        cost_estimate=cost,
    )(x)


# ---------------------------------------------------------------------------
# Thin wrapper mirroring MultiModalEncoder.forward (post-backbone compute).
# ---------------------------------------------------------------------------
class MultiModalEncoderPallas:

    def __init__(self, hidden=128, proj=128, frames=8, dtype=jnp.float32):
        self.hidden, self.proj, self.frames, self.dtype = hidden, proj, frames, dtype
        k = jax.random.PRNGKey(0)
        k_img, k_vid, k_aud = jax.random.split(k, 3)
        scale = 1.0 / jnp.sqrt(hidden)
        # visual_projection (Linear(hidden, proj, bias=False)) weights, stored
        # bf16 so the MXU runs at native rate; accumulation / norm stay f32.
        self.weights = {
            'image': (jax.random.normal(k_img, (hidden, proj)) * scale).astype(jnp.bfloat16),
            'video': (jax.random.normal(k_vid, (hidden, proj)) * scale).astype(jnp.bfloat16),
            'audio': (jax.random.normal(k_aud, (hidden, proj)) * scale).astype(jnp.bfloat16),
        }
        self._mxu_rows = _mxu_m_rows()

    def __call__(self, inputs):
        # ---- visual modalities: grouped projection + L2 normalize ----------
        entries = [(name, inputs[name]['pooler_output'])
                   for name in ('image', 'video', 'audio') if name in inputs]
        pooled_out = {}
        if entries:
            max_rows = max(p.shape[0] for _, p in entries)
            # MXU-M-tile-aligned batch tile; each modality pads only to a tile
            # multiple (at most one mostly-padded tile per modality).
            tb = min(self._mxu_rows, _round_up(max_rows, 8))
            chunks, tile_groups, offsets = [], [], {}
            off = 0
            for gi, (name, pooled) in enumerate(entries):
                r = pooled.shape[0]
                r_pad = _round_up(r, tb)
                chunks.append(jnp.pad(pooled, ((0, r_pad - r), (0, 0)))
                              .astype(jnp.bfloat16))
                tile_groups += [gi] * (r_pad // tb)
                offsets[name] = (off, r)
                off += r_pad
            x_cat = jnp.concatenate(chunks, axis=0)
            w_stack = jnp.stack([self.weights[name] for name, _ in entries])
            tile_group = jnp.array(tile_groups, dtype=jnp.int32)
            y = grouped_project_l2_normalize(tile_group, x_cat, w_stack,
                                             tb=tb, out_dtype=self.dtype)
            for name, _ in entries:
                o, r = offsets[name]
                pooled_out[name] = y[o:o + r]

        # ---- text: L2 normalize only (no visual_projection) ----------------
        if 'text' in inputs:
            pooled_out['text'] = l2_normalize(inputs['text']['pooler_output'])

        # ---- assemble per-modality returns ----------------------------------
        returns = {}
        for name in ('image', 'audio', 'text'):
            if name in inputs:
                returns[name] = {
                    'last_hidden_state': inputs[name]['last_hidden_state'],
                    'pooler_output': pooled_out[name],
                }
        if 'video' in inputs:
            lhs = inputs['video']['last_hidden_state']          # [B*F, T, D]
            _, T, D = lhs.shape
            lhs4 = lhs.reshape(-1, self.frames, T, D)            # [B, F, T, D]
            returns['video'] = {
                'last_hidden_state': temporal_mean(lhs4),        # [B, T, D]
                'pooler_output': pooled_out['video'],
            }
        return returns


# ---------------------------------------------------------------------------
# Pure-JAX references for correctness checking.
# ---------------------------------------------------------------------------
def _ref_proj_norm(x, w):
    y = x.astype(jnp.float32) @ w.astype(jnp.float32)
    return y / jnp.linalg.norm(y, axis=-1, keepdims=True)


def _ref_norm(x):
    x = x.astype(jnp.float32)
    return x / jnp.linalg.norm(x, axis=-1, keepdims=True)


if __name__ == "__main__":
    # Small but lane-dense shapes (feature dims multiples of 128).  Text width
    # deliberately differs from the vision hidden width to exercise the
    # decoupled text path.
    B, F, T, H, P, TEXT_H, SEQ = 2, 8, 16, 128, 128, 256, 8
    enc = MultiModalEncoderPallas(hidden=H, proj=P, frames=F)

    key = jax.random.PRNGKey(0)
    ks = jax.random.split(key, 8)
    inputs = {
        'image': {
            'pooler_output': jax.random.normal(ks[0], (B, H), jnp.float32),
            'last_hidden_state': jax.random.normal(ks[1], (B, T, H), jnp.float32),
        },
        'video': {
            'pooler_output': jax.random.normal(ks[2], (B * F, H), jnp.float32),
            'last_hidden_state': jax.random.normal(ks[3], (B * F, T, H), jnp.float32),
        },
        'audio': {
            'pooler_output': jax.random.normal(ks[4], (B, H), jnp.float32),
            'last_hidden_state': jax.random.normal(ks[5], (B, T, H), jnp.float32),
        },
        'text': {
            'pooler_output': jax.random.normal(ks[6], (B, TEXT_H), jnp.float32),
            'last_hidden_state': jax.random.normal(ks[7], (B, SEQ, TEXT_H), jnp.float32),
        },
    }

    out = enc(inputs)
    jax.block_until_ready(out)

    # Visual paths use bf16 MXU operands with f32 accumulate -> loose tolerance.
    assert jnp.allclose(
        out['image']['pooler_output'],
        _ref_proj_norm(inputs['image']['pooler_output'], enc.weights['image']),
        atol=2e-2)
    assert jnp.allclose(
        out['video']['pooler_output'],
        _ref_proj_norm(inputs['video']['pooler_output'], enc.weights['video']),
        atol=2e-2)
    assert jnp.allclose(
        out['audio']['pooler_output'],
        _ref_proj_norm(inputs['audio']['pooler_output'], enc.weights['audio']),
        atol=2e-2)
    # Text and temporal mean are pure f32 -> tight tolerance.
    assert jnp.allclose(out['text']['pooler_output'],
                        _ref_norm(inputs['text']['pooler_output']), atol=1e-4)
    ref_video_lhs = inputs['video']['last_hidden_state'].reshape(
        B, F, T, H).mean(axis=1)
    assert jnp.allclose(out['video']['last_hidden_state'], ref_video_lhs,
                        atol=1e-4)

    assert out['image']['pooler_output'].shape == (B, P)
    assert out['video']['pooler_output'].shape == (B * F, P)
    assert out['audio']['pooler_output'].shape == (B, P)
    assert out['text']['pooler_output'].shape == (B, TEXT_H)
    assert out['video']['last_hidden_state'].shape == (B, T, H)

    print("KERNEL_OK")
</pallas_src>

<mosaic_0001>
module attributes {stable_mosaic.version = 11 : i64} {
  func.func @_grouped_proj_norm_kernel(%arg0: i32, %arg1: memref<3xi32, #tpu.memory_space<smem>>, %arg2: memref<16x128xbf16, #tpu.memory_space<vmem>>, %arg3: memref<1x128x128xbf16, #tpu.memory_space<vmem>>, %arg4: memref<16x128xf32, #tpu.memory_space<vmem>>) attributes {dimension_semantics = [#tpu.dimension_semantics<parallel>], iteration_bounds = array<i64: 3>, scalar_prefetch = 1 : i64, scratch_operands = 0 : i64, tpu.core_type = #tpu.core_type<tc>, window_params = [{transform_indices = @transform_0, window_bounds = array<i64: 16, 128>}, {transform_indices = @transform_1, window_bounds = array<i64: 1, 128, 128>}, {transform_indices = @transform_2, window_bounds = array<i64: 16, 128>}]} {
    %c0 = arith.constant 0 : index
    %c0_0 = arith.constant 0 : index
    %0 = vector.load %arg2[%c0, %c0_0] : memref<16x128xbf16, #tpu.memory_space<vmem>>, vector<16x128xbf16>
    %c0_1 = arith.constant 0 : index
    %c0_2 = arith.constant 0 : index
    %c0_3 = arith.constant 0 : index
    %1 = vector.load %arg3[%c0_1, %c0_2, %c0_3] : memref<1x128x128xbf16, #tpu.memory_space<vmem>>, vector<1x128x128xbf16>
    %2 = vector.shape_cast %1 : vector<1x128x128xbf16> to vector<128x128xbf16>
    %cst = arith.constant dense<0.000000e+00> : vector<16x128xf32>
    %3 = tpu.matmul %0, %2, %cst {dimension_numbers = #tpu.dot_dimension_numbers<[1], [0], [0], [1], [0, 0, 1, 1], [], []>} : vector<16x128xbf16>, vector<128x128xbf16>, vector<16x128xf32> -> vector<16x128xf32>
    %4 = arith.mulf %3, %3 : vector<16x128xf32>
    %cst_4 = arith.constant dense<0.000000e+00> : vector<16xf32>
    %5 = vector.multi_reduction <add>, %4, %cst_4 [1] : vector<16x128xf32> to vector<16xf32>
    %6 = vector.shape_cast %5 : vector<16xf32> to vector<16x1xf32>
    %cst_5 = arith.constant 9.99999996E-13 : f32
    %7 = vector.broadcast %cst_5 : f32 to vector<16x1xf32>
    %8 = arith.maximumf %6, %7 : vector<16x1xf32>
    %9 = math.rsqrt %8 : vector<16x1xf32>
    %10 = vector.broadcast %9 : vector<16x1xf32> to vector<16x128xf32>
    %11 = arith.mulf %3, %10 : vector<16x128xf32>
    %c0_6 = arith.constant 0 : index
    %c0_7 = arith.constant 0 : index
    %12 = vector.load %arg4[%c0_6, %c0_7] : memref<16x128xf32, #tpu.memory_space<vmem>>, vector<16x128xf32>
    tpu.vector_store %arg4[%c0_6, %c0_7], %11 {strides = array<i32>} : memref<16x128xf32, #tpu.memory_space<vmem>>, vector<16x128xf32>,
    return
  }
  func.func @transform_0(%arg0: i32, %arg1: memref<3xi32, #tpu.memory_space<smem>>) -> (i32, i32) {
    %c0_i32 = arith.constant 0 : i32
    %c0_i32_0 = arith.constant 0 : i32
    return %arg0, %c0_i32 : i32, i32
  }
  func.func @transform_1(%arg0: i32, %arg1: memref<3xi32, #tpu.memory_space<smem>>) -> (i32, i32, i32) {
    %0 = arith.index_cast %arg0 : i32 to index
    %1 = memref.load %arg1[%0] : memref<3xi32, #tpu.memory_space<smem>>
    %c0_i32 = arith.constant 0 : i32
    %c0_i32_0 = arith.constant 0 : i32
    %c0_i32_1 = arith.constant 0 : i32
    return %1, %c0_i32, %c0_i32_0 : i32, i32, i32
  }
  func.func @transform_2(%arg0: i32, %arg1: memref<3xi32, #tpu.memory_space<smem>>) -> (i32, i32) {
    %c0_i32 = arith.constant 0 : i32
    %c0_i32_0 = arith.constant 0 : i32
    return %arg0, %c0_i32 : i32, i32
  }
}

</mosaic_0001>

<llo_original>
// kernel: tpu_custom_call.1
$region0: #{tpu_custom_call.1}
  #allocation0 [shape = 'u32[]', space=smem, size = 0x4, offset = 0x4, fixed_abs, tag = 'smem constant byte address 0x4 - core index']
  #allocation1 [shape = 'u32[72,128]{1,0:T(1,128)}', space=vmem, size = 0x9000, scoped, tag = 'internal scratch']
  #allocation2 [shape = 's32[1]{0}', space=sflag, size = 0x4, scoped, tag = 'scoped memory for tpu_custom_call.1']
  #allocation3 [shape = 'u8[512]{0}', space=smem, size = 0x200, scoped, tag = 'prefetched SMEM operand 0']
  %s0 = inlined_call_operand.hbm [shape: s32[3], index: 0, kind: input, shape index: {}]
  %s1 = inlined_call_operand.hbm [shape: bf16[48,128], index: 1, kind: input, shape index: {}]
  %s2 = inlined_call_operand.hbm [shape: bf16[3,128,128], index: 2, kind: input, shape index: {}]
  %s3 = inlined_call_operand.hbm [shape: f32[48,128], index: 3, kind: output, shape index: {}]
  %s4 = sld [smem:[#allocation0]]
  $region49: #{tpu_custom_call.1} parent=0
    _
  %s6 = ssub.s32 1, %s4
  %s7 = scalar_select 0, %s6, %s4
  %s9 = sshll.u32 %s0, 4
  %s10 = int_to_ptr.hbm [resolvable:$true] %s9
  %12 = dma.hbm_to_smem %s10, 16, [#allocation3], [#allocation2]
  %14 = dma.done [#allocation2], 16
  %15 = sfence
  $region1: #{tpu_custom_call.1} parent=0
    #allocation4 [shape = 'u8[8192]{0}', space=vmem, size = 0x2000, scoped, tag = 'input window, operand 1']
    #allocation5 [shape = 's32[2]{0}', space=sflag, size = 0x8, scoped, tag = 'scoped memory for tpu_custom_call.1']
    #allocation6 [shape = 's32[2]{0}', space=sflag, size = 0x8, scoped, tag = 'scoped memory for tpu_custom_call.1']
    #allocation7 [shape = 'u8[65536]{0}', space=vmem, size = 0x10000, scoped, tag = 'input window, operand 2']
    #allocation8 [shape = 's32[2]{0}', space=sflag, size = 0x8, scoped, tag = 'scoped memory for tpu_custom_call.1']
    #allocation9 [shape = 'u8[16384]{0}', space=vmem, size = 0x4000, scoped, tag = 'output window, operand 0']
    %16 = vsyncpa [#allocation5], 0
    %s17 = scalar_lea.sflag [#allocation5], 1
    %18 = vsyncpa %s17, 0
    %19 = vsyncpa [#allocation8], 0
    %s20 = scalar_lea.sflag [#allocation8], 1
    %21 = vsyncpa %s20, 0
    %22 = vsyncpa [#allocation6], 0
    %s23 = scalar_lea.sflag [#allocation6], 1
    %24 = vsyncpa %s23, 0
    loop: start=0, step=1, limit=5
    $region2: #{tpu_custom_call.1} parent=1 // loop_pre_header
      _
    $region3: #{tpu_custom_call.1} parent=1 // loop_header
      %s26 = sphi 0, %s30
      %p27 = scmp.ge.s32.totalorder %s26, 5
      %s36 = sphi 0, %s38
      %s39 = sphi 0, %s36
      %s40 = sphi 0, %s39
      %s56 = sphi 0, %s40
      %s64 = sphi 0, %s66
      %s67 = sphi 0, %s64
      %s68 = sphi 0, %s67
      %s84 = sphi 0, %s68
      %s90 = sphi 0, %s92
      %s93 = sphi 0, %s90
      %s94 = sphi 0, %s93
      %s110 = sphi 0, %s94
    $region4: #{tpu_custom_call.1} parent=1 // loop_header_branch
      %29 = sbr.rel (%p27) target = $region8
    $region5: #{tpu_custom_call.1} parent=1 // loop_body
      %s31 = ssub.s32 %s26, 1
      %s32 = ssub.s32 %s26, 2
      %s33 = sadd.s32 %s26, 1
      %s34 = ssub.s32 %s26, %s33
      %p35 = scmp.eq.s32.totalorder %s34, 0
      %s37 = sadd.s32 %s36, 1
      %s38 = scalar_select %p35, %s36, %s37
      %p41 = pneg %p35
      %p42 = scmp.eq.s32.totalorder %s26, 2
      %p43 = por %p41, %p42
      %p44 = scmp.ne.s32.totalorder %s36, %s39
      %p45 = scmp.eq.s32.totalorder %s26, 0
      %p46 = por %p44, %p45
      %p47 = scmp.ne.s32.totalorder %s36, %s39
      %p48 = scmp.eq.s32.totalorder %s31, 2
      %p49 = por %p47, %p48
      %p50 = scmp.ne.s32.totalorder %s39, %s40
      %p51 = scmp.eq.s32.totalorder %s31, 0
      %p52 = por %p50, %p51
      %p53 = scmp.ne.s32.totalorder %s39, %s40
      %p54 = scmp.eq.s32.totalorder %s32, 2
      %p55 = por %p53, %p54
      %p57 = scmp.ne.s32.totalorder %s40, %s56
      %p58 = scmp.eq.s32.totalorder %s32, 0
      %p59 = por %p57, %p58
      %s60 = sld [smem:[#allocation3 + %s26]]
      %s61 = sld [smem:[#allocation3 + %s33]]
      %s62 = ssub.s32 %s60, %s61
      %p63 = scmp.eq.s32.totalorder %s62, 0
      %s65 = sadd.s32 %s64, 1
      %s66 = scalar_select %p63, %s64, %s65
      %p69 = pneg %p63
      %p70 = scmp.eq.s32.totalorder %s26, 2
      %p71 = por %p69, %p70
      %p72 = scmp.ne.s32.totalorder %s64, %s67
      %p73 = scmp.eq.s32.totalorder %s26, 0
      %p74 = por %p72, %p73
      %p75 = scmp.ne.s32.totalorder %s64, %s67
      %p76 = scmp.eq.s32.totalorder %s31, 2
      %p77 = por %p75, %p76
      %p78 = scmp.ne.s32.totalorder %s67, %s68
      %p79 = scmp.eq.s32.totalorder %s31, 0
      %p80 = por %p78, %p79
      %p81 = scmp.ne.s32.totalorder %s67, %s68
      %p82 = scmp.eq.s32.totalorder %s32, 2
      %p83 = por %p81, %p82
      %p85 = scmp.ne.s32.totalorder %s68, %s84
      %p86 = scmp.eq.s32.totalorder %s32, 0
      %p87 = por %p85, %p86
      %s88 = ssub.s32 %s26, %s33
      %p89 = scmp.eq.s32.totalorder %s88, 0
      %s91 = sadd.s32 %s90, 1
      %s92 = scalar_select %p89, %s90, %s91
      %p95 = pneg %p89
      %p96 = scmp.eq.s32.totalorder %s26, 2
      %p97 = por %p95, %p96
      %p98 = scmp.ne.s32.totalorder %s90, %s93
      %p99 = scmp.eq.s32.totalorder %s26, 0
      %p100 = por %p98, %p99
      %p101 = scmp.ne.s32.totalorder %s90, %s93
      %p102 = scmp.eq.s32.totalorder %s31, 2
      %p103 = por %p101, %p102
      %p104 = scmp.ne.s32.totalorder %s93, %s94
      %p105 = scmp.eq.s32.totalorder %s31, 0
      %p106 = por %p104, %p105
      %p107 = scmp.ne.s32.totalorder %s93, %s94
      %p108 = scmp.eq.s32.totalorder %s32, 2
      %p109 = por %p107, %p108
      %p111 = scmp.ne.s32.totalorder %s94, %s110
      %p112 = scmp.eq.s32.totalorder %s32, 0
      %p113 = por %p111, %p112
      %p114 = scmp.le.s32.totalorder 1, %s26
      %p115 = scmp.lt.s32.totalorder %s26, 4
      %p116 = pnand %p114, %p115
      %p117 = pneg %p116
      // Predicated region
      $region9: #{tpu_custom_call.1} parent=5 // pred_check
        _
      $region10: #{tpu_custom_call.1} parent=5 // pred_check_branch
        %119 = sbr.rel (%p116) target = $region12
      $region11: #{tpu_custom_call.1} parent=5 // pred_region
        %s120 = ssub.s32 %s26, 1
      $region12: #{tpu_custom_call.1} parent=5 // pred_fallthru
        _
      %p121 = scmp.lt.s32.totalorder %s26, 3
      // Predicated region
      $region13: #{tpu_custom_call.1} parent=5 // pred_check
        %p122 = pneg %p121
      $region14: #{tpu_custom_call.1} parent=5 // pred_check_branch
        %124 = sbr.rel (%p122) target = $region16
      $region15: #{tpu_custom_call.1} parent=5 // pred_region
        // Predicated region
        $region17: #{tpu_custom_call.1} parent=15 // pred_check
          %p125 = pneg %p46
        $region18: #{tpu_custom_call.1} parent=15 // pred_check_branch
          %127 = sbr.rel (%p125) target = $region20
        $region19: #{tpu_custom_call.1} parent=15 // pred_region
          %s128 = sand.u32 %s36, 1
          %s129 = scalar_lea.sflag [#allocation5], %s128
          %s130 = sand.u32 %s36, 1
          %s131 = smul.addr %s130, 8
          %s132 = scalar_lea.vmem [#allocation4], %s131
          %s133 = smul.u32 2, %s26
          %135 = vsyncadd %s129, 0
          %s136 = smul.addr %s133, 4
          %s137 = scalar_lea.hbm %s1, %s136
          %s138 = sshll.u32 %s137, 4
          %s139 = int_to_ptr.hbm [resolvable:$true] %s138
          %s140 = sshll.u32 %s132, 4
          %s141 = int_to_ptr.vmem [resolvable:$true] %s140
          %146 = dma.hbm_to_vmem [thread:$0]  %s139, 128, %s141, %s129, 64, 64, 4
        $region20: #{tpu_custom_call.1} parent=15 // pred_fallthru
          _
        // Predicated region
        $region21: #{tpu_custom_call.1} parent=15 // pred_check
          %p147 = pneg %p74
        $region22: #{tpu_custom_call.1} parent=15 // pred_check_branch
          %149 = sbr.rel (%p147) target = $region24
        $region23: #{tpu_custom_call.1} parent=15 // pred_region
          %s150 = sand.u32 %s64, 1
          %s151 = scalar_lea.sflag [#allocation8], %s150
          %s152 = sand.u32 %s64, 1
          %s153 = smul.addr %s152, 64
          %s154 = scalar_lea.vmem [#allocation7], %s153
          %s155 = sld [smem:[#allocation3 + %s26]]
          %157 = vsyncadd %s151, 0
          %s158 = smul.addr %s155, 16
          %s159 = smul.addr %s158, 4
          %s160 = scalar_lea.hbm %s2, %s159
          %s161 = sshll.u32 %s160, 4
          %s162 = int_to_ptr.hbm [resolvable:$true] %s161
          %s163 = sshll.u32 %s154, 4
          %s164 = int_to_ptr.vmem [resolvable:$true] %s163
          %169 = dma.hbm_to_vmem [thread:$0]  %s162, 1024, %s164, %s151, 64, 64, 4
        $region24: #{tpu_custom_call.1} parent=15 // pred_fallthru
          _
      $region16: #{tpu_custom_call.1} parent=5 // pred_fallthru
        _
      %p170 = scmp.le.s32.totalorder 1, %s26
      %p171 = scmp.lt.s32.totalorder %s26, 4
      %p172 = pnand %p170, %p171
      %p173 = pneg %p172
      // Predicated region
      $region25: #{tpu_custom_call.1} parent=5 // pred_check
        _
      $region26: #{tpu_custom_call.1} parent=5 // pred_check_branch
        %175 = sbr.rel (%p172) target = $region28
      $region27: #{tpu_custom_call.1} parent=5 // pred_region
        %s176 = ssub.s32 %s26, 1
        %s177 = sand.u32 %s39, 1
        %s178 = scalar_lea.sflag [#allocation5], %s177
        %s179 = sand.u32 %s39, 1
        %s180 = smul.addr %s179, 8
        %s181 = scalar_lea.vmem [#allocation4], %s180
        // Predicated region
        $region29: #{tpu_custom_call.1} parent=27 // pred_check
          %p182 = pneg %p52
        $region30: #{tpu_custom_call.1} parent=27 // pred_check_branch
          %184 = sbr.rel (%p182) target = $region32
        $region31: #{tpu_custom_call.1} parent=27 // pred_region
          %186 = dma.done %s178, 128
        $region32: #{tpu_custom_call.1} parent=27 // pred_fallthru
          _
        %s187 = sand.u32 %s67, 1
        %s188 = scalar_lea.sflag [#allocation8], %s187
        %s189 = sand.u32 %s67, 1
        %s190 = smul.addr %s189, 64
        %s191 = scalar_lea.vmem [#allocation7], %s190
        // Predicated region
        $region33: #{tpu_custom_call.1} parent=27 // pred_check
          %p192 = pneg %p80
        $region34: #{tpu_custom_call.1} parent=27 // pred_check_branch
          %194 = sbr.rel (%p192) target = $region36
        $region35: #{tpu_custom_call.1} parent=27 // pred_region
          %196 = dma.done %s188, 1024
        $region36: #{tpu_custom_call.1} parent=27 // pred_fallthru
          _
        %s197 = sand.u32 %s39, 1
        %s198 = scalar_lea.sflag [#allocation5], %s197
        %s199 = sand.u32 %s39, 1
        %s200 = smul.addr %s199, 8
        %s201 = scalar_lea.vmem [#allocation4], %s200
        %p202 = pneg %p52
        %p203 = pneg %p49
        %s204 = sand.u32 %s67, 1
        %s205 = scalar_lea.sflag [#allocation8], %s204
        %s206 = sand.u32 %s67, 1
        %s207 = smul.addr %s206, 64
        %s208 = scalar_lea.vmem [#allocation7], %s207
        %p209 = pneg %p80
        %p210 = pneg %p77
        %p211 = pneg %p106
        %p212 = pneg %p103
        %s213 = sand.u32 %s93, 1
        %s214 = scalar_lea.sflag [#allocation6], %s213
        %s215 = sand.u32 %s93, 1
        %s216 = smul.addr %s215, 16
        %s217 = scalar_lea.vmem [#allocation9], %s216
        %s218 = smul.u32 2, %s31
        %s219 = sld [smem:[#allocation3 + %s31]]
        %s220 = smul.u32 2, %s31
        %v221 = vld [vmem:[%s181] sm:$0xf]
        %v222 = vld [vmem:[%s181 + $0x4] sm:$0xf]
        %v223 = vld [vmem:[%s191] sm:$0xf]
        %v224 = vld [vmem:[%s191 + $0x4] sm:$0xf]
        %v225 = vld [vmem:[%s191 + $0x8] sm:$0xf]
        %v226 = vld [vmem:[%s191 + $0xc] sm:$0xf]
        %v227 = vld [vmem:[%s191 + $0x10] sm:$0xf]
        %v228 = vld [vmem:[%s191 + $0x14] sm:$0xf]
        %v229 = vld [vmem:[%s191 + $0x18] sm:$0xf]
        %v230 = vld [vmem:[%s191 + $0x1c] sm:$0xf]
        %v231 = vld [vmem:[%s191 + $0x20] sm:$0xf]
        %v232 = vld [vmem:[%s191 + $0x24] sm:$0xf]
        %v233 = vld [vmem:[%s191 + $0x28] sm:$0xf]
        %v234 = vld [vmem:[%s191 + $0x2c] sm:$0xf]
        %v235 = vld [vmem:[%s191 + $0x30] sm:$0xf]
        %v236 = vld [vmem:[%s191 + $0x34] sm:$0xf]
        %v237 = vld [vmem:[%s191 + $0x38] sm:$0xf]
        %v238 = vld [vmem:[%s191 + $0x3c] sm:$0xf]
        %v241 = vunpack.c.l.b16 %v221
        %v242 = vunpack.c.l.b16 %v222
        %v243 = vpack.c.b16 %v242, %v241
        %v261 = vunpack.c.l.b16 %v223
        %v262 = vunpack.c.l.b16 %v224
        %v263 = vunpack.c.l.b16 %v225
        %v264 = vunpack.c.l.b16 %v226
        %v265 = vunpack.c.l.b16 %v227
        %v266 = vunpack.c.l.b16 %v228
        %v267 = vunpack.c.l.b16 %v229
        %v268 = vunpack.c.l.b16 %v230
        %v269 = vunpack.c.l.b16 %v231
        %v270 = vunpack.c.l.b16 %v232
        %v271 = vunpack.c.l.b16 %v233
        %v272 = vunpack.c.l.b16 %v234
        %v273 = vunpack.c.l.b16 %v235
        %v274 = vunpack.c.l.b16 %v236
        %v275 = vunpack.c.l.b16 %v237
        %v276 = vunpack.c.l.b16 %v238
        %v277 = vpack.c.b16 %v262, %v261
        %v278 = vpack.c.b16 %v264, %v263
        %v279 = vpack.c.b16 %v266, %v265
        %v280 = vpack.c.b16 %v268, %v267
        %v281 = vpack.c.b16 %v270, %v269
        %v282 = vpack.c.b16 %v272, %v271
        %v283 = vpack.c.b16 %v274, %v273
        %v284 = vpack.c.b16 %v276, %v275
        %293 = vmatpush.bf16.msra.mxu0 %v284
        %294 = vmatpush.bf16.msra.mxu0 %v283
        %295 = vmatpush.bf16.msra.mxu0 %v282
        %296 = vmatpush.bf16.msra.mxu0 %v281
        %297 = vmatpush.bf16.msra.mxu0 %v280
        %298 = vmatpush.bf16.msra.mxu0 %v279
        %299 = vmatpush.bf16.msra.mxu0 %v278
        %300 = vmatpush.bf16.msra.mxu0 %v277
        %301 = vmatmul.bf16.gmra.mxu0 %v243
        %v302 = vpop.f32.mrf.mxu0
        %v303 = vadd.f32 0.0, %v302
        %v304 = vpop.f32.mrf.mxu0
        %v305 = vadd.f32 0.0, %v304
        %306 = vdwg.mxu0
        %v307 = vmul.f32 %v303, %v303
        %v308 = vmul.f32 %v305, %v305
        %309 = vadd.xlane.f32.xlu0 %v307
        %v310 = vpop.xlane.xlu0 %309
        %311 = vadd.xlane.f32.xlu0 %v308
        %v312 = vpop.xlane.xlu0 %311
        %v313 = vmax.f32 %v310, 1e-12
        %v314 = vmax.f32 %v312, 1e-12
        %v315 = vrsqrt.pop %v313
        %v316 = vmul.f32 %v315, %v313
        %v317 = vmul.f32 %v316, %v315
        %v318 = vmul.f32 0.5, %v317
        %v319 = vsub.f32 1.5, %v318
        %v320 = vmul.f32 %v315, %v319
        %vm321 = vweird.f32 %v313
        %vm322 = vweird.f32 %v315
        %vm323 = vmor %vm321, %vm322
        %v324 = vsel %vm323, %v315, %v320
        %v325 = vrsqrt.pop %v314
        %v326 = vmul.f32 %v325, %v314
        %v327 = vmul.f32 %v326, %v325
        %v328 = vmul.f32 0.5, %v327
        %v329 = vsub.f32 1.5, %v328
        %v330 = vmul.f32 %v325, %v329
        %vm331 = vweird.f32 %v314
        %vm332 = vweird.f32 %v325
        %vm333 = vmor %vm331, %vm332
        %v334 = vsel %vm333, %v325, %v330
        %v335 = vmul.f32 %v303, %v324
        %v336 = vmul.f32 %v305, %v334
        %337 = vst [vmem:[%s217] sm:$0xff] %v335
        %338 = vst [vmem:[%s217 + $0x8] sm:$0xff] %v336
        %s339 = sand.u32 %s93, 1
        %s340 = scalar_lea.sflag [#allocation6], %s339
        %s341 = sand.u32 %s93, 1
        %s342 = smul.addr %s341, 16
        %s343 = scalar_lea.vmem [#allocation9], %s342
        // Predicated region
        $region37: #{tpu_custom_call.1} parent=27 // pred_check
          %p344 = pneg %p103
        $region38: #{tpu_custom_call.1} parent=27 // pred_check_branch
          %346 = sbr.rel (%p344) target = $region40
        $region39: #{tpu_custom_call.1} parent=27 // pred_region
          %s347 = smul.u32 2, %s31
          %349 = vsyncadd %s340, 0
          %s350 = smul.addr %s347, 8
          %s351 = scalar_lea.hbm %s3, %s350
          %s352 = sshll.u32 %s343, 4
          %s353 = int_to_ptr.vmem [resolvable:$true] %s352
          %s354 = sshll.u32 %s351, 4
          %s355 = int_to_ptr.hbm [resolvable:$true] %s354
          %360 = dma.vmem_to_hbm [thread:$0]  %s353, 256, %s355, %s340, 128, 128, 8
        $region40: #{tpu_custom_call.1} parent=27 // pred_fallthru
          _
      $region28: #{tpu_custom_call.1} parent=5 // pred_fallthru
        _
      %p361 = scmp.le.s32.totalorder 2, %s26
      // Predicated region
      $region41: #{tpu_custom_call.1} parent=5 // pred_check
        %p362 = pneg %p361
      $region42: #{tpu_custom_call.1} parent=5 // pred_check_branch
        %364 = sbr.rel (%p362) target = $region44
      $region43: #{tpu_custom_call.1} parent=5 // pred_region
        %s365 = ssub.s32 %s26, 2
        // Predicated region
        $region45: #{tpu_custom_call.1} parent=43 // pred_check
          %p366 = pneg %p109
        $region46: #{tpu_custom_call.1} parent=43 // pred_check_branch
          %368 = sbr.rel (%p366) target = $region48
        $region47: #{tpu_custom_call.1} parent=43 // pred_region
          %s369 = sand.u32 %s94, 1
          %s370 = scalar_lea.sflag [#allocation6], %s369
          %s371 = sand.u32 %s94, 1
          %s372 = smul.addr %s371, 16
          %s373 = scalar_lea.vmem [#allocation9], %s372
          %375 = dma.done %s370, 256
        $region48: #{tpu_custom_call.1} parent=43 // pred_fallthru
          _
      $region44: #{tpu_custom_call.1} parent=5 // pred_fallthru
        _
    $region6: #{tpu_custom_call.1} parent=1 // loop_footer
      %s30 = sadd.s32 1, %s26
    $region7: #{tpu_custom_call.1} parent=1 // loop_footer_branch
      %25 = sbr.rel target = $region3
    $region8: #{tpu_custom_call.1} parent=1 // loop_exit
      _
    %376 = vsyncpa [#allocation5], 1
    %s377 = scalar_lea.sflag [#allocation5], 1
    %378 = vsyncpa %s377, 1
    %379 = vsyncpa [#allocation8], 1
    %s380 = scalar_lea.sflag [#allocation8], 1
    %381 = vsyncpa %s380, 1
    %382 = vsyncpa [#allocation6], 1
    %s383 = scalar_lea.sflag [#allocation6], 1
    %384 = vsyncpa %s383, 1

</llo_original>
